<compile_context>
chip_gen: v5e
topology: v5e:2x2
jax: 0.10.0
libtpu: 0.0.40
codegen_flags: <defaults>
</compile_context>

<pallas_src>
import functools

import jax
import jax.numpy as jnp
from jax import lax
from jax.experimental import pallas as pl
from jax.experimental.pallas import tpu as pltpu

LANE = 128  # TPU lane width; logits padded to this for a lane-dense store


def _round_up(x, m):
    return ((x + m - 1) // m) * m


def _fnn_kernel(idx_ref,   # (TB, S)      int32  token ids (VMEM tile)
                m_ref,     # (V_pad, H)   bf16   prefolded (emb / S) @ w1^T
                b1_ref,    # (1, H)       f32
                w2_ref,    # (H, LANE)    bf16   layer2 weight^T, zero-padded
                b2_ref,    # (1, LANE)    f32    zero-padded
                out_ref,   # (TB, LANE)   f32
                *, seq_len):
    tb = idx_ref.shape[0]
    v_pad = m_ref.shape[0]

    # --- fused nn.EmbeddingBag(mode='mean') + layer1 ------------------------
    # Build per-bag token counts with full-vreg VPU compares (no scalar loads,
    # no XLU concat).  Tokens outside [0, V) never match the iota -> contribute
    # zero, so there is no OOB read hazard.
    ids = idx_ref[...]                                            # (TB, S) int32
    vocab_iota = lax.broadcasted_iota(jnp.int32, (tb, v_pad), 1)  # (TB, V_pad)
    counts = jnp.zeros((tb, v_pad), jnp.float32)
    for s in range(seq_len):                                      # short static S loop
        counts = counts + (vocab_iota == ids[:, s:s + 1]).astype(jnp.float32)

    # counts @ M on the MXU (1/S is folded into M), f32 accumulation.
    h = jnp.dot(counts.astype(m_ref.dtype), m_ref[...],
                preferred_element_type=jnp.float32) + b1_ref[...]
    h = jnp.maximum(h, 0.0)                                       # ReLU in f32

    # --- layer2: lane-dense (TB, 128) store ---------------------------------
    out = jnp.dot(h.astype(w2_ref.dtype), w2_ref[...],
                  preferred_element_type=jnp.float32) + b2_ref[...]
    out_ref[...] = out.astype(out_ref.dtype)


def prepare_params(emb_table, w1, b1, w2, b2, seq_len, *,
                   param_dtype=jnp.bfloat16):
    """One-time weight transforms, hoisted out of the forward path."""
    H, D = w1.shape
    C = w2.shape[0]
    V = emb_table.shape[0]
    v_pad = _round_up(V, LANE)          # lane-pad the vocab for dense counts

    # EmbeddingBag(mean) + layer1 are linear -> prefold:  M = (emb / S) @ w1^T
    m = (emb_table.astype(jnp.float32) / float(seq_len)) @ w1.astype(jnp.float32).T
    m_pad = jnp.zeros((v_pad, H), jnp.float32).at[:V, :].set(m)

    b1r = b1.astype(jnp.float32).reshape(1, H)
    w2p = jnp.zeros((H, LANE), jnp.float32).at[:, :C].set(w2.astype(jnp.float32).T)
    b2p = jnp.zeros((1, LANE), jnp.float32).at[:, :C].set(b2.astype(jnp.float32))

    return dict(m=m_pad.astype(param_dtype),      # bf16 residency (MXU-native)
                b1=b1r,                           # biases stay f32
                w2=w2p.astype(param_dtype),
                b2=b2p,
                num_classes=C, seq_len=seq_len)


def first_neural_network(data_input, params, *, tile_b=128):
    """Forward pass matching the PyTorch module (fixed-length bags)."""
    B, S = data_input.shape
    assert S == params["seq_len"]
    m, b1, w2, b2 = params["m"], params["b1"], params["w2"], params["b2"]
    v_pad, H = m.shape
    C = params["num_classes"]

    # --- batch tiling --------------------------------------------------------
    # Big tiles amortize the ~0.35us/grid-step overhead and fill the MXU M dim;
    # when the batch allows, make sure there are >= 2 tiles so the "parallel"
    # grid axis can be sharded across both TensorCores on v7x.
    tile_b = _round_up(max(8, tile_b), 8)
    b_pad8 = _round_up(B, 8)
    tb = min(tile_b, b_pad8)
    if pl.cdiv(b_pad8, tb) < 2 and b_pad8 >= 16:
        tb = _round_up(pl.cdiv(b_pad8, 2), 8)
    n_tiles = pl.cdiv(B, tb)
    b_pad = n_tiles * tb

    idx = data_input.astype(jnp.int32)
    if b_pad != B:
        idx = jnp.pad(idx, ((0, b_pad - B), (0, 0)))   # pad rows use token 0

    kernel = functools.partial(_fnn_kernel, seq_len=S)

    flops = 2 * b_pad * (v_pad * H + H * LANE)
    bytes_accessed = (b_pad * S * 4
                      + m.size * m.dtype.itemsize
                      + b1.size * 4
                      + w2.size * w2.dtype.itemsize
                      + b2.size * 4
                      + b_pad * LANE * 4)

    out = pl.pallas_call(
        kernel,
        out_shape=jax.ShapeDtypeStruct((b_pad, LANE), jnp.float32),
        grid_spec=pltpu.PrefetchScalarGridSpec(
            num_scalar_prefetch=0,
            grid=(n_tiles,),
            in_specs=[
                pl.BlockSpec((tb, S), lambda i: (i, 0)),        # token ids tile
                pl.BlockSpec((v_pad, H), lambda i: (0, 0)),     # prefolded table
                pl.BlockSpec((1, H), lambda i: (0, 0)),         # b1
                pl.BlockSpec((H, LANE), lambda i: (0, 0)),      # w2^T (padded)
                pl.BlockSpec((1, LANE), lambda i: (0, 0)),      # b2 (padded)
            ],
            out_specs=pl.BlockSpec((tb, LANE), lambda i: (i, 0)),
        ),
        compiler_params=pltpu.CompilerParams(
            dimension_semantics=("parallel",),      # batch tiles across TCs on v7x
            vmem_limit_bytes=32 * 1024 * 1024,      # explicit, safe on v5e/v6e/v7x
        ),
        cost_estimate=pl.CostEstimate(
            flops=flops, transcendentals=0, bytes_accessed=bytes_accessed),
    )(idx, m, b1, w2, b2)

    return jnp.squeeze(out[:B, :C])                 # mimics output_layer2.squeeze()


if __name__ == "__main__":
    # Small deterministic setup consistent with the module:
    #   vocab=50 pretrained vectors of dim D (= input_size), hidden=H, classes=C.
    V, D, H, C = 50, 16, 32, 2
    B, S = 8, 8

    key = jax.random.PRNGKey(0)
    k_emb, k_w1, k_b1, k_w2, k_b2, k_idx = jax.random.split(key, 6)

    emb_table = jax.random.normal(k_emb, (V, D), dtype=jnp.float32)   # pretrained vectors
    w1 = jax.random.normal(k_w1, (H, D), dtype=jnp.float32) * 0.1     # layer1 weight
    b1 = jax.random.normal(k_b1, (H,), dtype=jnp.float32) * 0.1       # layer1 bias
    w2 = jax.random.normal(k_w2, (C, H), dtype=jnp.float32) * 0.1     # layer2 weight
    b2 = jax.random.normal(k_b2, (C,), dtype=jnp.float32) * 0.1       # layer2 bias

    data_input = jax.random.randint(k_idx, (B, S), 0, V, dtype=jnp.int32)

    params = prepare_params(emb_table, w1, b1, w2, b2, seq_len=S)
    out = first_neural_network(data_input, params)
    out = jax.block_until_ready(out)

    # Pure-JAX f32 reference (same math as the PyTorch module, no Pallas).
    ref = jnp.take(emb_table, data_input, axis=0).mean(axis=1)
    ref = jnp.maximum(ref @ w1.T + b1, 0.0) @ w2.T + b2
    ref = jnp.squeeze(ref)

    assert out.shape == ref.shape, (out.shape, ref.shape)
    # bf16 residency of the prefolded table/weights bounds the error well below
    # this tolerance at these magnitudes.
    assert jnp.allclose(out, ref, atol=1e-2, rtol=1e-2), \
        float(jnp.max(jnp.abs(out - ref)))

    print("KERNEL_OK")
</pallas_src>

<mosaic_0001>
module attributes {stable_mosaic.version = 11 : i64} {
  func.func @_fnn_kernel(%arg0: i32, %arg1: memref<8x8xi32, #tpu.memory_space<vmem>>, %arg2: memref<128x32xbf16, #tpu.memory_space<vmem>>, %arg3: memref<1x32xf32, #tpu.memory_space<vmem>>, %arg4: memref<32x128xbf16, #tpu.memory_space<vmem>>, %arg5: memref<1x128xf32, #tpu.memory_space<vmem>>, %arg6: memref<8x128xf32, #tpu.memory_space<vmem>>) attributes {dimension_semantics = [#tpu.dimension_semantics<parallel>], iteration_bounds = array<i64: 1>, scalar_prefetch = 0 : i64, scratch_operands = 0 : i64, tpu.core_type = #tpu.core_type<tc>, window_params = [{transform_indices = @transform_0, window_bounds = array<i64: 8, 8>}, {pipeline_mode = #tpu.pipeline_mode<synchronous>, transform_indices = @transform_1, window_bounds = array<i64: 128, 32>}, {pipeline_mode = #tpu.pipeline_mode<synchronous>, transform_indices = @transform_2, window_bounds = array<i64: 1, 32>}, {pipeline_mode = #tpu.pipeline_mode<synchronous>, transform_indices = @transform_3, window_bounds = array<i64: 32, 128>}, {pipeline_mode = #tpu.pipeline_mode<synchronous>, transform_indices = @transform_4, window_bounds = array<i64: 1, 128>}, {transform_indices = @transform_5, window_bounds = array<i64: 8, 128>}]} {
    %c0 = arith.constant 0 : index
    %c0_0 = arith.constant 0 : index
    %0 = vector.load %arg1[%c0, %c0_0] : memref<8x8xi32, #tpu.memory_space<vmem>>, vector<8x8xi32>
    %1 = tpu.iota {dimensions = array<i32: 1>} : vector<8x128xi32>
    %cst = arith.constant 0.000000e+00 : f32
    %2 = vector.broadcast %cst : f32 to vector<8x128xf32>
    %3 = vector.extract_strided_slice %0 {offsets = [0, 0], sizes = [8, 1], strides = [1, 1]} : vector<8x8xi32> to vector<8x1xi32>
    %4 = vector.broadcast %3 : vector<8x1xi32> to vector<8x128xi32>
    %5 = arith.cmpi eq, %1, %4 : vector<8x128xi32>
    %6 = arith.extui %5 : vector<8x128xi1> to vector<8x128xi32>
    %7 = arith.sitofp %6 : vector<8x128xi32> to vector<8x128xf32>
    %8 = arith.addf %2, %7 : vector<8x128xf32>
    %9 = vector.extract_strided_slice %0 {offsets = [0, 1], sizes = [8, 1], strides = [1, 1]} : vector<8x8xi32> to vector<8x1xi32>
    %10 = vector.broadcast %9 : vector<8x1xi32> to vector<8x128xi32>
    %11 = arith.cmpi eq, %1, %10 : vector<8x128xi32>
    %12 = arith.extui %11 : vector<8x128xi1> to vector<8x128xi32>
    %13 = arith.sitofp %12 : vector<8x128xi32> to vector<8x128xf32>
    %14 = arith.addf %8, %13 : vector<8x128xf32>
    %15 = vector.extract_strided_slice %0 {offsets = [0, 2], sizes = [8, 1], strides = [1, 1]} : vector<8x8xi32> to vector<8x1xi32>
    %16 = vector.broadcast %15 : vector<8x1xi32> to vector<8x128xi32>
    %17 = arith.cmpi eq, %1, %16 : vector<8x128xi32>
    %18 = arith.extui %17 : vector<8x128xi1> to vector<8x128xi32>
    %19 = arith.sitofp %18 : vector<8x128xi32> to vector<8x128xf32>
    %20 = arith.addf %14, %19 : vector<8x128xf32>
    %21 = vector.extract_strided_slice %0 {offsets = [0, 3], sizes = [8, 1], strides = [1, 1]} : vector<8x8xi32> to vector<8x1xi32>
    %22 = vector.broadcast %21 : vector<8x1xi32> to vector<8x128xi32>
    %23 = arith.cmpi eq, %1, %22 : vector<8x128xi32>
    %24 = arith.extui %23 : vector<8x128xi1> to vector<8x128xi32>
    %25 = arith.sitofp %24 : vector<8x128xi32> to vector<8x128xf32>
    %26 = arith.addf %20, %25 : vector<8x128xf32>
    %27 = vector.extract_strided_slice %0 {offsets = [0, 4], sizes = [8, 1], strides = [1, 1]} : vector<8x8xi32> to vector<8x1xi32>
    %28 = vector.broadcast %27 : vector<8x1xi32> to vector<8x128xi32>
    %29 = arith.cmpi eq, %1, %28 : vector<8x128xi32>
    %30 = arith.extui %29 : vector<8x128xi1> to vector<8x128xi32>
    %31 = arith.sitofp %30 : vector<8x128xi32> to vector<8x128xf32>
    %32 = arith.addf %26, %31 : vector<8x128xf32>
    %33 = vector.extract_strided_slice %0 {offsets = [0, 5], sizes = [8, 1], strides = [1, 1]} : vector<8x8xi32> to vector<8x1xi32>
    %34 = vector.broadcast %33 : vector<8x1xi32> to vector<8x128xi32>
    %35 = arith.cmpi eq, %1, %34 : vector<8x128xi32>
    %36 = arith.extui %35 : vector<8x128xi1> to vector<8x128xi32>
    %37 = arith.sitofp %36 : vector<8x128xi32> to vector<8x128xf32>
    %38 = arith.addf %32, %37 : vector<8x128xf32>
    %39 = vector.extract_strided_slice %0 {offsets = [0, 6], sizes = [8, 1], strides = [1, 1]} : vector<8x8xi32> to vector<8x1xi32>
    %40 = vector.broadcast %39 : vector<8x1xi32> to vector<8x128xi32>
    %41 = arith.cmpi eq, %1, %40 : vector<8x128xi32>
    %42 = arith.extui %41 : vector<8x128xi1> to vector<8x128xi32>
    %43 = arith.sitofp %42 : vector<8x128xi32> to vector<8x128xf32>
    %44 = arith.addf %38, %43 : vector<8x128xf32>
    %45 = vector.extract_strided_slice %0 {offsets = [0, 7], sizes = [8, 1], strides = [1, 1]} : vector<8x8xi32> to vector<8x1xi32>
    %46 = vector.broadcast %45 : vector<8x1xi32> to vector<8x128xi32>
    %47 = arith.cmpi eq, %1, %46 : vector<8x128xi32>
    %48 = arith.extui %47 : vector<8x128xi1> to vector<8x128xi32>
    %49 = arith.sitofp %48 : vector<8x128xi32> to vector<8x128xf32>
    %50 = arith.addf %44, %49 : vector<8x128xf32>
    %51 = arith.truncf %50 : vector<8x128xf32> to vector<8x128xbf16>
    %c0_1 = arith.constant 0 : index
    %c0_2 = arith.constant 0 : index
    %52 = vector.load %arg2[%c0_1, %c0_2] : memref<128x32xbf16, #tpu.memory_space<vmem>>, vector<128x32xbf16>
    %cst_3 = arith.constant dense<0.000000e+00> : vector<8x32xf32>
    %53 = tpu.matmul %51, %52, %cst_3 {dimension_numbers = #tpu.dot_dimension_numbers<[1], [0], [0], [1], [0, 0, 1, 1], [], []>} : vector<8x128xbf16>, vector<128x32xbf16>, vector<8x32xf32> -> vector<8x32xf32>
    %c0_4 = arith.constant 0 : index
    %c0_5 = arith.constant 0 : index
    %54 = vector.load %arg3[%c0_4, %c0_5] : memref<1x32xf32, #tpu.memory_space<vmem>>, vector<1x32xf32>
    %55 = vector.broadcast %54 : vector<1x32xf32> to vector<8x32xf32>
    %56 = arith.addf %53, %55 : vector<8x32xf32>
    %cst_6 = arith.constant 0.000000e+00 : f32
    %57 = vector.broadcast %cst_6 : f32 to vector<8x32xf32>
    %58 = arith.maximumf %56, %57 : vector<8x32xf32>
    %59 = arith.truncf %58 : vector<8x32xf32> to vector<8x32xbf16>
    %c0_7 = arith.constant 0 : index
    %c0_8 = arith.constant 0 : index
    %60 = vector.load %arg4[%c0_7, %c0_8] : memref<32x128xbf16, #tpu.memory_space<vmem>>, vector<32x128xbf16>
    %cst_9 = arith.constant dense<0.000000e+00> : vector<8x128xf32>
    %61 = tpu.matmul %59, %60, %cst_9 {dimension_numbers = #tpu.dot_dimension_numbers<[1], [0], [0], [1], [0, 0, 1, 1], [], []>} : vector<8x32xbf16>, vector<32x128xbf16>, vector<8x128xf32> -> vector<8x128xf32>
    %c0_10 = arith.constant 0 : index
    %c0_11 = arith.constant 0 : index
    %62 = vector.load %arg5[%c0_10, %c0_11] : memref<1x128xf32, #tpu.memory_space<vmem>>, vector<1x128xf32>
    %63 = vector.broadcast %62 : vector<1x128xf32> to vector<8x128xf32>
    %64 = arith.addf %61, %63 : vector<8x128xf32>
    %c0_12 = arith.constant 0 : index
    %c0_13 = arith.constant 0 : index
    %65 = vector.load %arg6[%c0_12, %c0_13] : memref<8x128xf32, #tpu.memory_space<vmem>>, vector<8x128xf32>
    tpu.vector_store %arg6[%c0_12, %c0_13], %64 {strides = array<i32>} : memref<8x128xf32, #tpu.memory_space<vmem>>, vector<8x128xf32>,
    return
  }
  func.func @transform_0(%arg0: i32) -> (i32, i32) {
    %c0_i32 = arith.constant 0 : i32
    %c0_i32_0 = arith.constant 0 : i32
    return %arg0, %c0_i32 : i32, i32
  }
  func.func @transform_1(%arg0: i32) -> (i32, i32) {
    %c0_i32 = arith.constant 0 : i32
    %c0_i32_0 = arith.constant 0 : i32
    %c0_i32_1 = arith.constant 0 : i32
    return %c0_i32, %c0_i32_0 : i32, i32
  }
  func.func @transform_2(%arg0: i32) -> (i32, i32) {
    %c0_i32 = arith.constant 0 : i32
    %c0_i32_0 = arith.constant 0 : i32
    %c0_i32_1 = arith.constant 0 : i32
    return %c0_i32, %c0_i32_0 : i32, i32
  }
  func.func @transform_3(%arg0: i32) -> (i32, i32) {
    %c0_i32 = arith.constant 0 : i32
    %c0_i32_0 = arith.constant 0 : i32
    %c0_i32_1 = arith.constant 0 : i32
    return %c0_i32, %c0_i32_0 : i32, i32
  }
  func.func @transform_4(%arg0: i32) -> (i32, i32) {
    %c0_i32 = arith.constant 0 : i32
    %c0_i32_0 = arith.constant 0 : i32
    %c0_i32_1 = arith.constant 0 : i32
    return %c0_i32, %c0_i32_0 : i32, i32
  }
  func.func @transform_5(%arg0: i32) -> (i32, i32) {
    %c0_i32 = arith.constant 0 : i32
    %c0_i32_0 = arith.constant 0 : i32
    return %arg0, %c0_i32 : i32, i32
  }
}

</mosaic_0001>

<llo_original>
// kernel: tpu_custom_call.1
$region0: #{tpu_custom_call.1}
  #allocation0 [shape = 'u32[]', space=smem, size = 0x4, offset = 0x4, fixed_abs, tag = 'smem constant byte address 0x4 - core index']
  #allocation1 [shape = 'u32[72,128]{1,0:T(1,128)}', space=vmem, size = 0x9000, scoped, tag = 'internal scratch']
  %s0 = inlined_call_operand.vmem [shape: s32[8,8], index: 0, kind: input, shape index: {}]
  %s1 = inlined_call_operand.vmem [shape: bf16[128,32], index: 1, kind: input, shape index: {}]
  %s2 = inlined_call_operand.vmem [shape: f32[1,32], index: 2, kind: input, shape index: {}]
  %s3 = inlined_call_operand.vmem [shape: bf16[32,128], index: 3, kind: input, shape index: {}]
  %s4 = inlined_call_operand.vmem [shape: f32[1,128], index: 4, kind: input, shape index: {}]
  %s5 = inlined_call_operand.hbm [shape: f32[8,128], index: 5, kind: output, shape index: {}]
  %s6 = sld [smem:[#allocation0]]
  $region30: #{tpu_custom_call.1} parent=0
    _
  %s8 = ssub.s32 1, %s6
  %s9 = scalar_select 0, %s8, %s6
  $region1: #{tpu_custom_call.1} parent=0
    #allocation2 [shape = 'u8[4096]{0}', space=vmem, size = 0x1000, scoped, tag = 'output window, operand 0, single buffered']
    #allocation3 [shape = 's32[1]{0}', space=sflag, size = 0x4, scoped, tag = 'scoped memory for tpu_custom_call.1']
    %10 = vsyncpa [#allocation3], 0
    // Predicated region
    $region2: #{tpu_custom_call.1} parent=1 // pred_check
      _
    $region3: #{tpu_custom_call.1} parent=1 // pred_check_branch
      %12 = sbr.rel (0) target = $region5
    $region4: #{tpu_custom_call.1} parent=1 // pred_region
      _
    $region5: #{tpu_custom_call.1} parent=1 // pred_fallthru
      _
    // Predicated region
    $region6: #{tpu_custom_call.1} parent=1 // pred_check
      _
    $region7: #{tpu_custom_call.1} parent=1 // pred_check_branch
      %14 = sbr.rel (0) target = $region9
    $region8: #{tpu_custom_call.1} parent=1 // pred_region
      _
    $region9: #{tpu_custom_call.1} parent=1 // pred_fallthru
      _
    // Predicated region
    $region10: #{tpu_custom_call.1} parent=1 // pred_check
      _
    $region11: #{tpu_custom_call.1} parent=1 // pred_check_branch
      %16 = sbr.rel (0) target = $region13
    $region12: #{tpu_custom_call.1} parent=1 // pred_region
      _
    $region13: #{tpu_custom_call.1} parent=1 // pred_fallthru
      _
    // Predicated region
    $region14: #{tpu_custom_call.1} parent=1 // pred_check
      _
    $region15: #{tpu_custom_call.1} parent=1 // pred_check_branch
      %18 = sbr.rel (0) target = $region17
    $region16: #{tpu_custom_call.1} parent=1 // pred_region
      _
    $region17: #{tpu_custom_call.1} parent=1 // pred_fallthru
      _
    // Predicated region
    $region18: #{tpu_custom_call.1} parent=1 // pred_check
      _
    $region19: #{tpu_custom_call.1} parent=1 // pred_check_branch
      %20 = sbr.rel (0) target = $region21
    $region20: #{tpu_custom_call.1} parent=1 // pred_region
      _
    $region21: #{tpu_custom_call.1} parent=1 // pred_fallthru
      _
    %v22 = vld [vmem:[%s0] sm:$0xff]
    %v23 = vlaneseq
    %v24 = vand.u32 %v23, 127
    %25 = vset.pattern.permute.xlu0 0
    %26 = vperm.xlu0 %25, %v22
    %v27 = vpop.permute.xlu0 %26
    %vm28 = vcmp.eq.s32.totalorder %v24, %v27
    %v29 = vsel %vm28, 1, 0
    %v30 = vcvt.s32.f32 %v29
    %v31 = vadd.f32 %v30, 0.0
    %32 = vset.pattern.permute.xlu0 1
    %33 = vperm.xlu0 %32, %v22
    %v34 = vpop.permute.xlu0 %33
    %vm35 = vcmp.eq.s32.totalorder %v24, %v34
    %v36 = vsel %vm35, 1, 0
    %v37 = vcvt.s32.f32 %v36
    %v38 = vadd.f32 %v31, %v37
    %39 = vset.pattern.permute.xlu0 2
    %40 = vperm.xlu0 %39, %v22
    %v41 = vpop.permute.xlu0 %40
    %vm42 = vcmp.eq.s32.totalorder %v24, %v41
    %v43 = vsel %vm42, 1, 0
    %v44 = vcvt.s32.f32 %v43
    %v45 = vadd.f32 %v38, %v44
    %46 = vset.pattern.permute.xlu0 3
    %47 = vperm.xlu0 %46, %v22
    %v48 = vpop.permute.xlu0 %47
    %vm49 = vcmp.eq.s32.totalorder %v24, %v48
    %v50 = vsel %vm49, 1, 0
    %v51 = vcvt.s32.f32 %v50
    %v52 = vadd.f32 %v45, %v51
    %53 = vset.pattern.permute.xlu0 4
    %54 = vperm.xlu0 %53, %v22
    %v55 = vpop.permute.xlu0 %54
    %vm56 = vcmp.eq.s32.totalorder %v24, %v55
    %v57 = vsel %vm56, 1, 0
    %v58 = vcvt.s32.f32 %v57
    %v59 = vadd.f32 %v52, %v58
    %60 = vset.pattern.permute.xlu0 5
    %61 = vperm.xlu0 %60, %v22
    %v62 = vpop.permute.xlu0 %61
    %vm63 = vcmp.eq.s32.totalorder %v24, %v62
    %v64 = vsel %vm63, 1, 0
    %v65 = vcvt.s32.f32 %v64
    %v66 = vadd.f32 %v59, %v65
    %67 = vset.pattern.permute.xlu0 6
    %68 = vperm.xlu0 %67, %v22
    %v69 = vpop.permute.xlu0 %68
    %vm70 = vcmp.eq.s32.totalorder %v24, %v69
    %v71 = vsel %vm70, 1, 0
    %v72 = vcvt.s32.f32 %v71
    %v73 = vadd.f32 %v66, %v72
    %74 = vset.pattern.permute.xlu0 7
    %75 = vperm.xlu0 %74, %v22
    %v76 = vpop.permute.xlu0 %75
    %vm77 = vcmp.eq.s32.totalorder %v24, %v76
    %v78 = vsel %vm77, 1, 0
    %v79 = vcvt.s32.f32 %v78
    %v80 = vadd.f32 %v73, %v79
    %v81 = vpack.c.bf16 %v80, %v80
    %v82 = vld [vmem:[%s1] sm:$0xf]
    %v83 = vld [vmem:[%s1 + $0x4] sm:$0xf]
    %v84 = vld [vmem:[%s1 + $0x8] sm:$0xf]
    %v85 = vld [vmem:[%s1 + $0xc] sm:$0xf]
    %v86 = vld [vmem:[%s1 + $0x10] sm:$0xf]
    %v87 = vld [vmem:[%s1 + $0x14] sm:$0xf]
    %v88 = vld [vmem:[%s1 + $0x18] sm:$0xf]
    %v89 = vld [vmem:[%s1 + $0x1c] sm:$0xf]
    %v90 = vld [vmem:[%s1 + $0x20] sm:$0xf]
    %v91 = vld [vmem:[%s1 + $0x24] sm:$0xf]
    %v92 = vld [vmem:[%s1 + $0x28] sm:$0xf]
    %v93 = vld [vmem:[%s1 + $0x2c] sm:$0xf]
    %v94 = vld [vmem:[%s1 + $0x30] sm:$0xf]
    %v95 = vld [vmem:[%s1 + $0x34] sm:$0xf]
    %v96 = vld [vmem:[%s1 + $0x38] sm:$0xf]
    %v97 = vld [vmem:[%s1 + $0x3c] sm:$0xf]
    %v98 = vld [vmem:[%s2] sm:$0x1]
    %v100 = vperm.slane %v98, 0
    %v118 = vunpack.c.l.b16 %v82
    %v119 = vunpack.c.l.b16 %v83
    %v120 = vunpack.c.l.b16 %v84
    %v121 = vunpack.c.l.b16 %v85
    %v122 = vunpack.c.l.b16 %v86
    %v123 = vunpack.c.l.b16 %v87
    %v124 = vunpack.c.l.b16 %v88
    %v125 = vunpack.c.l.b16 %v89
    %v126 = vunpack.c.l.b16 %v90
    %v127 = vunpack.c.l.b16 %v91
    %v128 = vunpack.c.l.b16 %v92
    %v129 = vunpack.c.l.b16 %v93
    %v130 = vunpack.c.l.b16 %v94
    %v131 = vunpack.c.l.b16 %v95
    %v132 = vunpack.c.l.b16 %v96
    %v133 = vunpack.c.l.b16 %v97
    %v134 = vpack.c.b16 %v119, %v118
    %v135 = vpack.c.b16 %v121, %v120
    %v136 = vpack.c.b16 %v123, %v122
    %v137 = vpack.c.b16 %v125, %v124
    %v138 = vpack.c.b16 %v127, %v126
    %v139 = vpack.c.b16 %v129, %v128
    %v140 = vpack.c.b16 %v131, %v130
    %v141 = vpack.c.b16 %v133, %v132
    %150 = vmatpush.bf16.msra.mxu0 %v141
    %151 = vmatpush.bf16.msra.mxu0 %v140
    %152 = vmatpush.bf16.msra.mxu0 %v139
    %153 = vmatpush.bf16.msra.mxu0 %v138
    %154 = vmatpush.bf16.msra.mxu0 %v137
    %155 = vmatpush.bf16.msra.mxu0 %v136
    %156 = vmatpush.bf16.msra.mxu0 %v135
    %157 = vmatpush.bf16.msra.mxu0 %v134
    %158 = vmatmul.bf16.gmra.mxu0 %v81
    %v159 = vpop.f32.mrf.mxu0
    %v160 = vadd.f32 %v100, %v159
    %v161 = vpop.f32.mrf.mxu0
    %162 = vdwg.mxu0
    %v163 = vmax.f32 %v160, 0.0
    %v164 = vpack.c.bf16 %v163, %v163
    %v165 = vld [vmem:[%s3] sm:$0xf]
    %v166 = vld [vmem:[%s3 + $0x4] sm:$0xf]
    %v167 = vld [vmem:[%s3 + $0x8] sm:$0xf]
    %v168 = vld [vmem:[%s3 + $0xc] sm:$0xf]
    %v169 = vld [vmem:[%s4] sm:$0x1]
    %v171 = vperm.slane %v169, 0
    %v177 = vunpack.c.l.b16 %v165
    %v178 = vunpack.c.l.b16 %v166
    %v179 = vunpack.c.l.b16 %v167
    %v180 = vunpack.c.l.b16 %v168
    %v181 = vpack.c.b16 %v178, %v177
    %v182 = vpack.c.b16 %v180, %v179
    %vm185 = vcmask 261120
    %v187 = vsel %vm185, %v164, 0
    %189 = vmatpush.bf16.msra.mxu0 0
    %190 = vmatpush.bf16.msra.mxu0 0
    %191 = vmatpush.bf16.msra.mxu0 0
    %192 = vmatpush.bf16.msra.mxu0 0
    %193 = vmatpush.bf16.msra.mxu0 0
    %194 = vmatpush.bf16.msra.mxu0 0
    %195 = vmatpush.bf16.msra.mxu0 %v182
    %196 = vmatpush.bf16.msra.mxu0 %v181
    %197 = vmatmul.bf16.gmra.mxu0 %v187
    %v198 = vpop.f32.mrf.mxu0
    %v199 = vadd.f32 %v171, %v198
    %v200 = vpop.f32.mrf.mxu0
    %201 = vdwg.mxu0
    %202 = vst [vmem:[#allocation2] sm:$0xff] %v199
    // Predicated region
    $region22: #{tpu_custom_call.1} parent=1 // pred_check
      _
    $region23: #{tpu_custom_call.1} parent=1 // pred_check_branch
      %204 = sbr.rel (0) target = $region25
    $region24: #{tpu_custom_call.1} parent=1 // pred_region
      %206 = vsyncadd [#allocation3], 0
      %s208 = sshll.u32 [#allocation2], 4
      %s209 = int_to_ptr.vmem [resolvable:$true] %s208
      %s210 = sshll.u32 %s5, 4
      %s211 = int_to_ptr.hbm [resolvable:$true] %s210
      %213 = dma.vmem_to_hbm [thread:$0]  %s209, 128, %s211, [#allocation3]
    $region25: #{tpu_custom_call.1} parent=1 // pred_fallthru
      _
    // Predicated region
    $region26: #{tpu_custom_call.1} parent=1 // pred_check
      _
    $region27: #{tpu_custom_call.1} parent=1 // pred_check_branch
      %215 = sbr.rel (0) target = $region29
    $region28: #{tpu_custom_call.1} parent=1 // pred_region
      %217 = dma.done [#allocation3], 128
    $region29: #{tpu_custom_call.1} parent=1 // pred_fallthru
      _
    %218 = vsyncpa [#allocation3], 1

</llo_original>
